<compile_context>
chip_gen: v6e
topology: v6e:2x2x1
jax: 0.10.0
libtpu: 0.0.40
codegen_flags: <defaults>
</compile_context>

<pallas_src>
import math

import jax
import jax.numpy as jnp
from jax import lax
from jax.experimental import pallas as pl
from jax.experimental.pallas import tpu as pltpu

BT = 8  # images per grid step in the feature kernel


# -----------------------------------------------------------------------------
# _TernActive forward (ternarization) as a Pallas kernel over a 2-D weight view.
# Runs once per weight set inside prepare_params(), NOT per forward.
# -----------------------------------------------------------------------------
def _ternarize_kernel(w_ref, o_ref):
    w = w_ref[...]
    aw = jnp.abs(w)
    th = 0.05 * jnp.max(aw, keepdims=True)                      # (1, 1)
    mask = aw >= th                                             # |w| >= th
    cnt = jnp.sum(mask.astype(jnp.float32), keepdims=True)      # (1, 1)
    tot = jnp.sum(jnp.where(mask, aw, 0.0), keepdims=True)      # (1, 1)
    wv = tot / jnp.maximum(cnt, 1.0)                            # mean |w| over selected
    o_ref[...] = jnp.where(w >= th, wv, jnp.where(w <= -th, -wv, jnp.zeros_like(w)))


def ternarize(w2d):
    vmem = pl.BlockSpec(memory_space=pltpu.MemorySpace.VMEM)
    return pl.pallas_call(
        _ternarize_kernel,
        out_shape=jax.ShapeDtypeStruct(w2d.shape, w2d.dtype),
        in_specs=[vmem],
        out_specs=vmem,
    )(w2d)


# -----------------------------------------------------------------------------
# Fused feature kernel: conv1(3x3,pad1)+bias+ReLU+2x2maxpool -> conv2+bias+ReLU+
# 2x2 maxpool, for a tile of BT images.
#
# Layout trick: the pooled conv1 output lives on a zero-padded 16x16 grid per image
# (interior 14x14 = real data, border = conv2's zero padding), flattened to
# (BT*256, 32) rows = (image, pj, pi).  Each conv2 tap is then one shifted
# full-plane read + one (BT*256, 32) x (32, 64) matmul.  Pool2 is a max over four
# shifted full-plane reads; valid results sit at odd (pj, pi) and the wrapper
# slices them out with a free strided slice.
# -----------------------------------------------------------------------------
def _features_kernel(xq_ref, w1_ref, b1_ref, w2_ref, b2_ref, out_ref, pbuf, h2buf):
    # xq_ref : (4, BT, 256, 9)  bf16  im2col patches, one tensor per 2x2-pool quadrant
    # w1_ref : (9, 32)          bf16  ternarized conv1 taps
    # b1_ref : (1, 32)          f32
    # w2_ref : (9, 32, 64)      bf16  ternarized conv2 taps
    # b2_ref : (1, 64)          f32
    # out_ref: (BT, 256, 64)    bf16  pooled conv2 features on the padded 16x16 grid
    # pbuf   : (BT*256+64, 32)  f32   conv2 input staged with margins for shifted reads
    # h2buf  : (BT*256+32, 64)  f32   conv2 output staged for the pooling shifted reads
    Bt = out_ref.shape[0]
    M = Bt * 256
    PAD = 32

    # ---- conv1: one im2col matmul over all 4 pooling quadrants + quadrant max ----
    xq = xq_ref[...].reshape(4 * M, 9)                                      # bf16
    h = jnp.dot(xq, w1_ref[...], preferred_element_type=jnp.float32)        # (4M, 32)
    h4 = h.reshape(4, M, 32)
    m = jnp.maximum(jnp.maximum(h4[0], h4[1]), jnp.maximum(h4[2], h4[3]))   # 2x2 maxpool
    p1 = jnp.maximum(m + b1_ref[...], 0.0)                                  # bias + ReLU

    # rows are (image, pj, pi) on the padded 16x16 grid; zero the border rows so they
    # act as conv2's zero padding.
    ridx = lax.broadcasted_iota(jnp.int32, (M, 1), 0)
    pj = (ridx // 16) % 16
    pi = ridx % 16
    interior = (pj >= 1) & (pj <= 14) & (pi >= 1) & (pi <= 14)
    p1 = jnp.where(interior, p1, 0.0)

    # stage into a flat buffer with zero margins: each conv2 tap = one shifted plane.
    pbuf[pl.ds(0, PAD), :] = jnp.zeros((PAD, 32), jnp.float32)
    pbuf[pl.ds(PAD + M, PAD), :] = jnp.zeros((PAD, 32), jnp.float32)
    pbuf[pl.ds(PAD, M), :] = p1

    # ---- conv2: 9 per-tap full-plane matmuls, f32 accumulation ----
    acc = jnp.zeros((M, 64), jnp.float32)
    for t in range(9):
        ky, kx = t // 3, t % 3
        shift = (ky - 1) * 16 + (kx - 1)
        xs = pbuf[pl.ds(PAD + shift, M), :].astype(jnp.bfloat16)            # (M, 32)
        acc = acc + jnp.dot(xs, w2_ref[t], preferred_element_type=jnp.float32)
    h2 = jnp.maximum(acc + b2_ref[...], 0.0)                                # bias + ReLU

    # ---- 2x2 maxpool via four whole-plane shifted reads ----
    h2buf[pl.ds(0, M), :] = h2
    h2buf[pl.ds(M, 32), :] = jnp.zeros((32, 64), jnp.float32)
    pooled = jnp.maximum(
        jnp.maximum(h2buf[pl.ds(0, M), :], h2buf[pl.ds(1, M), :]),
        jnp.maximum(h2buf[pl.ds(16, M), :], h2buf[pl.ds(17, M), :]))

    # valid pooled values sit at odd (pj, pi) <= 13; zero the rest (wrapper slices
    # them away with a strided slice).
    kept = ((pj % 2) == 1) & (pj <= 13) & ((pi % 2) == 1) & (pi <= 13)
    pooled = jnp.where(kept, pooled, 0.0)

    out_ref[...] = pooled.reshape(Bt, 256, 64).astype(out_ref.dtype)


def conv_features(xq, w1, b1, w2, b2):
    Bp = xq.shape[1]
    return pl.pallas_call(
        _features_kernel,
        out_shape=jax.ShapeDtypeStruct((Bp, 256, 64), jnp.bfloat16),
        grid=(Bp // BT,),
        in_specs=[
            pl.BlockSpec((4, BT, 256, 9), lambda b: (0, b, 0, 0)),
            pl.BlockSpec((9, 32), lambda b: (0, 0)),
            pl.BlockSpec((1, 32), lambda b: (0, 0)),
            pl.BlockSpec((9, 32, 64), lambda b: (0, 0, 0)),
            pl.BlockSpec((1, 64), lambda b: (0, 0)),
        ],
        out_specs=pl.BlockSpec((BT, 256, 64), lambda b: (b, 0, 0)),
        scratch_shapes=[
            pltpu.VMEM((BT * 256 + 64, 32), jnp.float32),
            pltpu.VMEM((BT * 256 + 32, 64), jnp.float32),
        ],
        compiler_params=pltpu.CompilerParams(
            dimension_semantics=("parallel",),
            vmem_limit_bytes=48 * 1024 * 1024,
        ),
    )(xq, w1, b1, w2, b2)


# -----------------------------------------------------------------------------
# Fused classifier head: relu(x @ W1 + b1) @ W2 + b2, lane-dense (128-wide) logits.
# -----------------------------------------------------------------------------
def _mlp_kernel(x_ref, w1_ref, b1_ref, w2_ref, b2_ref, o_ref):
    h = jnp.dot(x_ref[...], w1_ref[...],
                preferred_element_type=jnp.float32) + b1_ref[...]
    h = jnp.maximum(h, 0.0)
    o_ref[...] = jnp.dot(h.astype(jnp.bfloat16), w2_ref[...],
                         preferred_element_type=jnp.float32) + b2_ref[...]


def mlp(x, w1, b1, w2, b2):
    vmem = pl.BlockSpec(memory_space=pltpu.MemorySpace.VMEM)
    return pl.pallas_call(
        _mlp_kernel,
        out_shape=jax.ShapeDtypeStruct((x.shape[0], w2.shape[1]), jnp.float32),
        in_specs=[vmem] * 5,
        out_specs=vmem,
    )(x, w1, b1, w2, b2)


# -----------------------------------------------------------------------------
# One-time weight prep: ternarize (Pallas) + repack into kernel layouts (bf16).
# This is hoisted out of the per-forward path (weights are loop-invariant).
# -----------------------------------------------------------------------------
def prepare_params(params):
    qc1 = ternarize(params["conv1_w"].reshape(32, 9))                        # (32, 9)
    w1 = qc1.T.astype(jnp.bfloat16)                                          # (9, 32)
    qc2 = ternarize(params["conv2_w"].reshape(64, 32 * 9)).reshape(64, 32, 3, 3)
    w2 = jnp.transpose(qc2, (2, 3, 1, 0)).reshape(9, 32, 64).astype(jnp.bfloat16)
    b1 = params["conv1_b"].reshape(1, 32).astype(jnp.float32)                # conv biases
    b2 = params["conv2_b"].reshape(1, 64).astype(jnp.float32)                # not ternarized

    tw1 = ternarize(params["fc1_w"])                                         # (200, 3136)
    # Permute the fc1 input dim once from PyTorch's (ch, h, w) flatten to the kernel's
    # (h, w, ch) flatten -> no per-forward activation transpose.
    fc1_w = jnp.transpose(tw1.reshape(200, 64, 7, 7), (2, 3, 1, 0)).reshape(3136, 200)
    fc1_w = fc1_w.astype(jnp.bfloat16)
    fc1_b = ternarize(params["fc1_b"].reshape(1, 200)).astype(jnp.float32)

    tw2 = ternarize(params["fc2_w"])                                         # (10, 200)
    fc2_w = jnp.pad(tw2.T, ((0, 0), (0, 118))).astype(jnp.bfloat16)          # (200, 128)
    fc2_b = jnp.pad(ternarize(params["fc2_b"].reshape(1, 10)),
                    ((0, 0), (0, 118))).astype(jnp.float32)                  # (1, 128)

    return {"w1": w1, "b1": b1, "w2": w2, "b2": b2,
            "fc1_w": fc1_w, "fc1_b": fc1_b, "fc2_w": fc2_w, "fc2_b": fc2_b}


# -----------------------------------------------------------------------------
# LeNet forward (Pallas path): 2 pallas_calls per forward.
# -----------------------------------------------------------------------------
def lenet_forward(prep, x_nchw):
    B = x_nchw.shape[0]
    Bp = ((B + BT - 1) // BT) * BT
    x = x_nchw.reshape(B, 28, 28)
    if Bp != B:
        x = jnp.pad(x, ((0, Bp - B), (0, 0), (0, 0)))

    # conv1 im2col (Cin=1 -> K=9), split into the four 2x2-pool quadrants and embedded
    # into the zero-padded 16x16 pooled grid that conv2 consumes directly.
    xp = jnp.pad(x, ((0, 0), (1, 1), (1, 1)))                                # (Bp, 30, 30)
    patches = jnp.stack([xp[:, ky:ky + 28, kx:kx + 28]
                         for ky in range(3) for kx in range(3)], axis=-1)    # (Bp,28,28,9)
    quads = jnp.stack([patches[:, dy::2, dx::2, :]
                       for dy in range(2) for dx in range(2)], axis=0)       # (4,Bp,14,14,9)
    xq = jnp.pad(quads, ((0, 0), (0, 0), (1, 1), (1, 1), (0, 0)))            # (4,Bp,16,16,9)
    xq = xq.reshape(4, Bp, 256, 9).astype(jnp.bfloat16)

    feat = conv_features(xq, prep["w1"], prep["b1"], prep["w2"], prep["b2"])  # (Bp,256,64)
    # keep the 7x7 valid pooled positions; order (h, w, ch) matches the permuted fc1_w.
    feat = feat.reshape(Bp, 16, 16, 64)[:, 1:15:2, 1:15:2, :].reshape(Bp, 7 * 7 * 64)

    logits = mlp(feat, prep["fc1_w"], prep["fc1_b"], prep["fc2_w"], prep["fc2_b"])
    return logits[:B, :10]


# -----------------------------------------------------------------------------
# Pure-JAX reference (numerical sanity check) and parameter init
# -----------------------------------------------------------------------------
_HI = lax.Precision.HIGHEST  # reference only; kernels use bf16 + f32 accumulation


def _ternarize_ref(w):
    aw = jnp.abs(w)
    th = 0.05 * jnp.max(aw)
    mask = aw >= th
    wv = jnp.sum(jnp.where(mask, aw, 0.0)) / jnp.maximum(jnp.sum(mask), 1)
    return jnp.where(w >= th, wv, jnp.where(w <= -th, -wv, 0.0))


def reference_forward(params, x):
    qw1 = _ternarize_ref(params["conv1_w"])
    qw2 = _ternarize_ref(params["conv2_w"])
    tw1 = _ternarize_ref(params["fc1_w"])
    tb1 = _ternarize_ref(params["fc1_b"])
    tw2 = _ternarize_ref(params["fc2_w"])
    tb2 = _ternarize_ref(params["fc2_b"])

    def conv(x, w, b):
        y = lax.conv_general_dilated(x, w, (1, 1), "SAME",
                                     dimension_numbers=("NCHW", "OIHW", "NCHW"),
                                     precision=_HI)
        return jax.nn.relu(y + b[None, :, None, None])

    def pool(x):
        return lax.reduce_window(x, -jnp.inf, lax.max, (1, 1, 2, 2), (1, 1, 2, 2), "VALID")

    h = pool(conv(x, qw1, params["conv1_b"]))
    h = pool(conv(h, qw2, params["conv2_b"]))
    f = h.reshape(h.shape[0], -1)
    h = jax.nn.relu(jnp.dot(f, tw1.T, precision=_HI) + tb1)
    return jnp.dot(h, tw2.T, precision=_HI) + tb2


def init_params(key):
    ks = jax.random.split(key, 8)

    def u(k, shape, fan_in):
        b = 1.0 / math.sqrt(fan_in)
        return jax.random.uniform(k, shape, jnp.float32, -b, b)

    return {
        "conv1_w": u(ks[0], (32, 1, 3, 3), 1 * 9),
        "conv1_b": u(ks[1], (32,), 1 * 9),
        "conv2_w": u(ks[2], (64, 32, 3, 3), 32 * 9),
        "conv2_b": u(ks[3], (64,), 32 * 9),
        "fc1_w": u(ks[4], (200, 7 * 7 * 64), 7 * 7 * 64),
        "fc1_b": u(ks[5], (200,), 7 * 7 * 64),
        "fc2_w": u(ks[6], (10, 200), 200),
        "fc2_b": u(ks[7], (10,), 200),
    }


if __name__ == "__main__":
    key = jax.random.PRNGKey(0)
    kx, kp = jax.random.split(key)
    params = init_params(kp)
    x = jax.random.normal(kx, (2, 1, 28, 28), dtype=jnp.float32)   # NCHW, MNIST-shaped

    prep = prepare_params(params)          # one-time ternarize + repack (hoisted)
    fwd = jax.jit(lenet_forward)

    out = jax.block_until_ready(fwd(prep, x))
    assert out.shape == (2, 10) and out.dtype == jnp.float32

    ref = jax.block_until_ready(reference_forward(params, x))
    # kernels run bf16-on-MXU with f32 accumulation -> slightly looser tolerance
    assert jnp.allclose(out, ref, rtol=2e-2, atol=2e-2), (
        "mismatch", float(jnp.max(jnp.abs(out - ref))))

    print("KERNEL_OK")
</pallas_src>

<mosaic_0001>
module attributes {stable_mosaic.version = 11 : i64} {
  func.func @_ternarize_kernel(%arg0: memref<32x9xf32, #tpu.memory_space<vmem>>, %arg1: memref<32x9xf32, #tpu.memory_space<vmem>>) attributes {dimension_semantics = [], scalar_prefetch = 0 : i64, scratch_operands = 0 : i64, tpu.core_type = #tpu.core_type<tc>} {
    %c0 = arith.constant 0 : index
    %c0_0 = arith.constant 0 : index
    %0 = vector.load %arg0[%c0, %c0_0] : memref<32x9xf32, #tpu.memory_space<vmem>>, vector<32x9xf32>
    %1 = math.absf %0 : vector<32x9xf32>
    %2 = vector.shape_cast %1 : vector<32x9xf32> to vector<1x32x9xf32>
    %cst = arith.constant dense<0xFF800000> : vector<1xf32>
    %3 = vector.multi_reduction <maximumf>, %2, %cst [1, 2] : vector<1x32x9xf32> to vector<1xf32>
    %4 = vector.shape_cast %3 : vector<1xf32> to vector<1x1x1xf32>
    %5 = vector.extract %4[0, 0, 0] : f32 from vector<1x1x1xf32>
    %6 = vector.broadcast %5 : f32 to vector<1x1xf32>
    %cst_1 = arith.constant 5.000000e-02 : f32
    %7 = vector.broadcast %cst_1 : f32 to vector<1x1xf32>
    %8 = arith.mulf %7, %6 : vector<1x1xf32>
    %9 = vector.broadcast %8 : vector<1x1xf32> to vector<32x9xf32>
    %10 = arith.cmpf oge, %1, %9 : vector<32x9xf32>
    %11 = arith.extui %10 : vector<32x9xi1> to vector<32x9xi32>
    %12 = arith.sitofp %11 : vector<32x9xi32> to vector<32x9xf32>
    %13 = vector.shape_cast %12 : vector<32x9xf32> to vector<1x32x9xf32>
    %cst_2 = arith.constant dense<0.000000e+00> : vector<1xf32>
    %14 = vector.multi_reduction <add>, %13, %cst_2 [1, 2] : vector<1x32x9xf32> to vector<1xf32>
    %15 = vector.shape_cast %14 : vector<1xf32> to vector<1x1x1xf32>
    %16 = vector.extract %15[0, 0, 0] : f32 from vector<1x1x1xf32>
    %17 = vector.broadcast %16 : f32 to vector<1x1xf32>
    %cst_3 = arith.constant 0.000000e+00 : f32
    %18 = vector.broadcast %cst_3 : f32 to vector<32x9xf32>
    %19 = arith.select %10, %1, %18 : vector<32x9xi1>, vector<32x9xf32>
    %20 = vector.shape_cast %19 : vector<32x9xf32> to vector<1x32x9xf32>
    %cst_4 = arith.constant dense<0.000000e+00> : vector<1xf32>
    %21 = vector.multi_reduction <add>, %20, %cst_4 [1, 2] : vector<1x32x9xf32> to vector<1xf32>
    %22 = vector.shape_cast %21 : vector<1xf32> to vector<1x1x1xf32>
    %23 = vector.extract %22[0, 0, 0] : f32 from vector<1x1x1xf32>
    %24 = vector.broadcast %23 : f32 to vector<1x1xf32>
    %cst_5 = arith.constant 1.000000e+00 : f32
    %25 = vector.broadcast %cst_5 : f32 to vector<1x1xf32>
    %26 = arith.maximumf %17, %25 : vector<1x1xf32>
    %27 = arith.divf %24, %26 : vector<1x1xf32>
    %28 = vector.broadcast %8 : vector<1x1xf32> to vector<32x9xf32>
    %29 = arith.cmpf oge, %0, %28 : vector<32x9xf32>
    %cst_6 = arith.constant 0.000000e+00 : f32
    %30 = vector.broadcast %cst_6 : f32 to vector<1x1xf32>
    %31 = arith.subf %30, %8 : vector<1x1xf32>
    %32 = vector.broadcast %31 : vector<1x1xf32> to vector<32x9xf32>
    %33 = arith.cmpf ole, %0, %32 : vector<32x9xf32>
    %cst_7 = arith.constant 0.000000e+00 : f32
    %34 = vector.broadcast %cst_7 : f32 to vector<1x1xf32>
    %35 = arith.subf %34, %27 : vector<1x1xf32>
    %cst_8 = arith.constant 0.000000e+00 : f32
    %36 = vector.broadcast %cst_8 : f32 to vector<32x9xf32>
    %37 = vector.shape_cast %35 : vector<1x1xf32> to vector<1x1xf32>
    %38 = vector.broadcast %37 : vector<1x1xf32> to vector<32x9xf32>
    %39 = arith.select %33, %38, %36 : vector<32x9xi1>, vector<32x9xf32>
    %40 = vector.shape_cast %27 : vector<1x1xf32> to vector<1x1xf32>
    %41 = vector.broadcast %40 : vector<1x1xf32> to vector<32x9xf32>
    %42 = arith.select %29, %41, %39 : vector<32x9xi1>, vector<32x9xf32>
    %c0_9 = arith.constant 0 : index
    %c0_10 = arith.constant 0 : index
    %43 = vector.load %arg1[%c0_9, %c0_10] : memref<32x9xf32, #tpu.memory_space<vmem>>, vector<32x9xf32>
    tpu.vector_store %arg1[%c0_9, %c0_10], %42 {strides = array<i32>} : memref<32x9xf32, #tpu.memory_space<vmem>>, vector<32x9xf32>,
    return
  }
}

</mosaic_0001>

<llo_original>
// kernel: tpu_custom_call.1
$region0: #{tpu_custom_call.1}
  #allocation0 [shape = 'u32[]', space=smem, size = 0x4, offset = 0x4, fixed_abs, tag = 'smem constant byte address 0x4 - core index']
  #allocation1 [shape = 'u32[144,128]{1,0:T(1,128)}', space=vmem, size = 0x12000, scoped, tag = 'internal scratch']
  %s0 = inlined_call_operand.vmem [shape: f32[32,9], index: 0, kind: input, shape index: {}]
  %s1 = inlined_call_operand.vmem [shape: f32[32,9], index: 1, kind: output, shape index: {}]
  %s2 = sld [smem:[#allocation0]]
  $region14: #{tpu_custom_call.1} parent=0
    _
  %s4 = ssub.s32 1, %s2
  %s5 = scalar_select 0, %s4, %s2
  // Predicated region
  $region2: #{tpu_custom_call.1} parent=0 // pred_check
    _
  $region3: #{tpu_custom_call.1} parent=0 // pred_check_branch
    %7 = sbr.rel (0) target = $region5
  $region4: #{tpu_custom_call.1} parent=0 // pred_region
    _
  $region5: #{tpu_custom_call.1} parent=0 // pred_fallthru
    _
  %v8 = vld [vmem:[%s0] sm:$0xff]
  %v9 = vld [vmem:[%s0 + $0x8] sm:$0xff]
  %v10 = vld [vmem:[%s0 + $0x10] sm:$0xff]
  %v11 = vld [vmem:[%s0 + $0x18] sm:$0xff]
  %v12 = vand.u32 2147483647, %v8
  %v13 = vand.u32 2147483647, %v9
  %v14 = vand.u32 2147483647, %v10
  %v15 = vand.u32 2147483647, %v11
  %vm16 = vcmask 72704
  %v17 = vsel %vm16, %v12, -inf
  %v18 = vsel %vm16, %v13, -inf
  %v19 = vsel %vm16, %v14, -inf
  %v20 = vsel %vm16, %v15, -inf
  %v21 = vmax.f32 %v17, %v18
  %v22 = vmax.f32 %v19, %v20
  %v23 = vmax.f32 %v21, %v22
  %24 = vmax.xlane.f32.xlu0 %v23
  %v25 = vpop.xlane.xlu0 %24
  %v26 = vrot.slane %v25, 4
  %v27 = vmax.f32 %v25, %v26
  %v28 = vrot.slane %v27, 2
  %v29 = vmax.f32 %v27, %v28
  %v30 = vrot.slane %v29, 1
  %v31 = vmax.f32 %v29, %v30
  %s32 = vtos %v31
  %v33 = vstv %s32
  %v34 = vmul.f32 %v33, 0.05
  %vm35 = vcmp.ge.f32.partialorder %v12, %v34
  %vm36 = vcmp.ge.f32.partialorder %v13, %v34
  %vm37 = vcmp.ge.f32.partialorder %v14, %v34
  %vm38 = vcmp.ge.f32.partialorder %v15, %v34
  %v39 = vsel %vm35, 1, 0
  %v40 = vsel %vm36, 1, 0
  %v41 = vsel %vm37, 1, 0
  %v42 = vsel %vm38, 1, 0
  %v43 = vcvt.s32.f32 %v39
  %v44 = vcvt.s32.f32 %v40
  %v45 = vcvt.s32.f32 %v41
  %v46 = vcvt.s32.f32 %v42
  %v47 = vsel %vm16, %v43, 0.0
  %v48 = vsel %vm16, %v44, 0.0
  %v49 = vadd.f32 %v47, %v48
  %v50 = vsel %vm16, %v45, 0.0
  %v51 = vadd.f32 %v49, %v50
  %v52 = vsel %vm16, %v46, 0.0
  %v53 = vadd.f32 %v51, %v52
  %54 = vadd.xlane.f32.xlu0 %v53
  %v55 = vpop.xlane.xlu0 %54
  %v56 = vrot.slane %v55, 4
  %v57 = vadd.f32 %v55, %v56
  %v58 = vrot.slane %v57, 2
  %v59 = vadd.f32 %v57, %v58
  %v60 = vrot.slane %v59, 1
  %v61 = vadd.f32 %v59, %v60
  %s62 = vtos %v61
  %v63 = vstv %s62
  %v64 = vsel %vm35, %v12, 0.0
  %v65 = vsel %vm36, %v13, 0.0
  %v66 = vsel %vm37, %v14, 0.0
  %v67 = vsel %vm38, %v15, 0.0
  %v68 = vsel %vm16, %v64, 0.0
  %v69 = vsel %vm16, %v65, 0.0
  %v70 = vadd.f32 %v68, %v69
  %v71 = vsel %vm16, %v66, 0.0
  %v72 = vadd.f32 %v70, %v71
  %v73 = vsel %vm16, %v67, 0.0
  %v74 = vadd.f32 %v72, %v73
  %75 = vadd.xlane.f32.xlu0 %v74
  %v76 = vpop.xlane.xlu0 %75
  %v77 = vrot.slane %v76, 4
  %v78 = vadd.f32 %v76, %v77
  %v79 = vrot.slane %v78, 2
  %v80 = vadd.f32 %v78, %v79
  %v81 = vrot.slane %v80, 1
  %v82 = vadd.f32 %v80, %v81
  %s83 = vtos %v82
  %v84 = vstv %s83
  %v85 = vmax.f32 %v63, 1.0
  %v86 = vrcp.pop %v85
  %v87 = vmul.f32 %v84, %v86
  %vm88 = vcmp.ge.f32.partialorder %v8, %v34
  %vm89 = vcmp.ge.f32.partialorder %v9, %v34
  %vm90 = vcmp.ge.f32.partialorder %v10, %v34
  %vm91 = vcmp.ge.f32.partialorder %v11, %v34
  %v92 = vsub.f32 0.0, %v34
  %vm93 = vcmp.le.f32.partialorder %v8, %v92
  %vm94 = vcmp.le.f32.partialorder %v9, %v92
  %vm95 = vcmp.le.f32.partialorder %v10, %v92
  %vm96 = vcmp.le.f32.partialorder %v11, %v92
  %v97 = vsub.f32 0.0, %v87
  %v98 = vsel %vm93, %v97, 0.0
  %v99 = vsel %vm94, %v97, 0.0
  %v100 = vsel %vm95, %v97, 0.0
  %v101 = vsel %vm96, %v97, 0.0
  %v102 = vsel %vm88, %v87, %v98
  %v103 = vsel %vm89, %v87, %v99
  %v104 = vsel %vm90, %v87, %v100
  %v105 = vsel %vm91, %v87, %v101
  %106 = vst.msk [vmem:[%s1] sm:$0xff] %vm16, %v102
  %107 = vst.msk [vmem:[%s1 + $0x8] sm:$0xff] %vm16, %v103
  %108 = vst.msk [vmem:[%s1 + $0x10] sm:$0xff] %vm16, %v104
  %109 = vst.msk [vmem:[%s1 + $0x18] sm:$0xff] %vm16, %v105
  // Predicated region
  $region6: #{tpu_custom_call.1} parent=0 // pred_check
    _
  $region7: #{tpu_custom_call.1} parent=0 // pred_check_branch
    %111 = sbr.rel (0) target = $region9
  $region8: #{tpu_custom_call.1} parent=0 // pred_region
    _
  $region9: #{tpu_custom_call.1} parent=0 // pred_fallthru
    _
  // Predicated region
  $region10: #{tpu_custom_call.1} parent=0 // pred_check
    _
  $region11: #{tpu_custom_call.1} parent=0 // pred_check_branch
    %113 = sbr.rel (0) target = $region13
  $region12: #{tpu_custom_call.1} parent=0 // pred_region
    _
  $region13: #{tpu_custom_call.1} parent=0 // pred_fallthru
    _

</llo_original>
